<compile_context>
chip_gen: v7x
topology: tpu7x:2x2x1
jax: 0.10.0
libtpu: 0.0.40
codegen_flags: <defaults>
</compile_context>

<pallas_src>
import jax
import jax.numpy as jnp
from jax.experimental import pallas as pl
from jax.experimental.pallas import tpu as pltpu


def _round_up(x: int, m: int) -> int:
    return ((x + m - 1) // m) * m


def _mean_module_kernel(x_ref, w1_ref, b1_ref, w2_ref, b2_ref, o_ref):
    # Layer 1: hidden = tanh(x @ W1 + b1). bf16 operands -> single-pass MXU,
    # f32 accumulation; bias-add and tanh in f32 (EUP).
    x = x_ref[...].astype(jnp.bfloat16)
    w1 = w1_ref[...].astype(jnp.bfloat16)
    h = jnp.tanh(
        jnp.dot(x, w1, preferred_element_type=jnp.float32) + b1_ref[...]
    )
    # Layer 2: out = tanh(h @ W2 + b2).
    w2 = w2_ref[...].astype(jnp.bfloat16)
    out = jnp.tanh(
        jnp.dot(h.astype(jnp.bfloat16), w2, preferred_element_type=jnp.float32)
        + b2_ref[...]
    )
    o_ref[...] = out.astype(o_ref.dtype)


def mean_module_forward(obs, w1, b1, w2, b2, *, block_m: int = 1024):
    """Fused forward pass.

    obs: [B, o_dim]
    w1 : [o_dim, hid_p]  (hidden pre-padded to a multiple of 128 in init)
    b1 : [1, hid_p]
    w2 : [hid_p, a_dim]
    b2 : [1, a_dim]
    Returns [B, a_dim].
    """
    B, o_dim = obs.shape
    hid_p = w1.shape[1]
    a_dim = w2.shape[1]
    dtype = obs.dtype

    # Batch tile: multiple of 8, capped at block_m. For larger batches, split in
    # two so the grid has >= 2 steps (lets v7x use both TensorCores; harmless on
    # single-TC v5e/v6e since 256+-row tiles still amortize step overhead).
    if B > 512:
        tm = min(block_m, max(256, _round_up((B + 1) // 2, 8)))
    else:
        tm = min(block_m, _round_up(B, 8))
    grid = (pl.cdiv(B, tm),)  # ragged last block is masked by Pallas

    itemsize = jnp.dtype(dtype).itemsize
    cost = pl.CostEstimate(
        flops=2 * B * (o_dim * hid_p + hid_p * a_dim),
        transcendentals=B * (hid_p + a_dim),
        bytes_accessed=itemsize * (
            B * o_dim + o_dim * hid_p + hid_p
            + hid_p * a_dim + a_dim + B * a_dim
        ),
    )

    return pl.pallas_call(
        _mean_module_kernel,
        out_shape=jax.ShapeDtypeStruct((B, a_dim), dtype),
        grid=grid,
        in_specs=[
            # obs: blocked over batch
            pl.BlockSpec((tm, o_dim), lambda i: (i, 0)),
            # weights / biases: VMEM-resident across all grid steps
            pl.BlockSpec((o_dim, hid_p), lambda i: (0, 0)),
            pl.BlockSpec((1, hid_p), lambda i: (0, 0)),
            pl.BlockSpec((hid_p, a_dim), lambda i: (0, 0)),
            pl.BlockSpec((1, a_dim), lambda i: (0, 0)),
        ],
        out_specs=pl.BlockSpec((tm, a_dim), lambda i: (i, 0)),
        compiler_params=pltpu.CompilerParams(
            dimension_semantics=("parallel",),  # batch grid shardable on v7x
        ),
        cost_estimate=cost,
    )(obs, w1, b1, w2, b2)


def init_params(key, o_dim, a_dim, hidden=64, dtype=jnp.float32):
    """Xavier-uniform weights (like nn.init.xavier_uniform_), zero biases.

    The hidden dimension is zero-padded to 128 lanes here, once, so the
    per-call forward issues no pad/slice ops. Padding is exact: tanh(0) = 0 and
    the corresponding W2 rows are zero, so padded hidden units contribute 0.
    """
    hid_p = max(_round_up(hidden, 128), 128)
    k1, k2 = jax.random.split(key)

    def xavier(k, fan_out, fan_in):
        bound = (6.0 / (fan_in + fan_out)) ** 0.5
        # PyTorch weight shape is (out, in); transpose to (in, out) for x @ W.
        w_torch = jax.random.uniform(k, (fan_out, fan_in), dtype,
                                     minval=-bound, maxval=bound)
        return w_torch.T

    w1 = xavier(k1, hidden, o_dim)                       # [o_dim, hidden]
    w2 = xavier(k2, a_dim, hidden)                       # [hidden, a_dim]

    w1_p = jnp.pad(w1, ((0, 0), (0, hid_p - hidden)))    # [o_dim, hid_p]
    b1_p = jnp.zeros((1, hid_p), dtype)                  # [1, hid_p]
    w2_p = jnp.pad(w2, ((0, hid_p - hidden), (0, 0)))    # [hid_p, a_dim]
    b2_p = jnp.zeros((1, a_dim), dtype)                  # [1, a_dim]
    return w1_p, b1_p, w2_p, b2_p


if __name__ == "__main__":
    key = jax.random.PRNGKey(0)
    k_obs, k_param = jax.random.split(key)

    batch, o_dim, a_dim = 8, 32, 8
    obs = jax.random.normal(k_obs, (batch, o_dim), jnp.float32)
    w1, b1, w2, b2 = init_params(k_param, o_dim, a_dim)

    fwd = jax.jit(mean_module_forward)
    out = jax.block_until_ready(fwd(obs, w1, b1, w2, b2))

    # Reference in plain JAX f32. Kernel uses bf16 MXU inputs with f32
    # accumulation, so compare with a relaxed tolerance.
    ref = jnp.tanh(jnp.tanh(obs @ w1 + b1) @ w2 + b2)
    assert out.shape == (batch, a_dim)
    assert jnp.allclose(out, ref, atol=2e-2, rtol=2e-2), "mismatch vs reference"

    print("KERNEL_OK")
</pallas_src>

<mosaic_0001>
module attributes {stable_mosaic.version = 11 : i64} {
  func.func @_mean_module_kernel(%arg0: i32, %arg1: memref<8x32xf32, #tpu.memory_space<vmem>>, %arg2: memref<32x128xf32, #tpu.memory_space<vmem>>, %arg3: memref<1x128xf32, #tpu.memory_space<vmem>>, %arg4: memref<128x8xf32, #tpu.memory_space<vmem>>, %arg5: memref<1x8xf32, #tpu.memory_space<vmem>>, %arg6: memref<8x8xf32, #tpu.memory_space<vmem>>) attributes {dimension_semantics = [#tpu.dimension_semantics<parallel>], iteration_bounds = array<i64: 1>, scalar_prefetch = 0 : i64, scratch_operands = 0 : i64, tpu.core_type = #tpu.core_type<tc>, window_params = [{transform_indices = @transform_0, window_bounds = array<i64: 8, 32>}, {pipeline_mode = #tpu.pipeline_mode<synchronous>, transform_indices = @transform_1, window_bounds = array<i64: 32, 128>}, {pipeline_mode = #tpu.pipeline_mode<synchronous>, transform_indices = @transform_2, window_bounds = array<i64: 1, 128>}, {pipeline_mode = #tpu.pipeline_mode<synchronous>, transform_indices = @transform_3, window_bounds = array<i64: 128, 8>}, {pipeline_mode = #tpu.pipeline_mode<synchronous>, transform_indices = @transform_4, window_bounds = array<i64: 1, 8>}, {transform_indices = @transform_5, window_bounds = array<i64: 8, 8>}]} {
    %c0 = arith.constant 0 : index
    %c0_0 = arith.constant 0 : index
    %0 = vector.load %arg1[%c0, %c0_0] : memref<8x32xf32, #tpu.memory_space<vmem>>, vector<8x32xf32>
    %1 = arith.truncf %0 : vector<8x32xf32> to vector<8x32xbf16>
    %c0_1 = arith.constant 0 : index
    %c0_2 = arith.constant 0 : index
    %2 = vector.load %arg2[%c0_1, %c0_2] : memref<32x128xf32, #tpu.memory_space<vmem>>, vector<32x128xf32>
    %3 = arith.truncf %2 : vector<32x128xf32> to vector<32x128xbf16>
    %cst = arith.constant dense<0.000000e+00> : vector<8x128xf32>
    %4 = tpu.matmul %1, %3, %cst {dimension_numbers = #tpu.dot_dimension_numbers<[1], [0], [0], [1], [0, 0, 1, 1], [], []>} : vector<8x32xbf16>, vector<32x128xbf16>, vector<8x128xf32> -> vector<8x128xf32>
    %c0_3 = arith.constant 0 : index
    %c0_4 = arith.constant 0 : index
    %5 = vector.load %arg3[%c0_3, %c0_4] : memref<1x128xf32, #tpu.memory_space<vmem>>, vector<1x128xf32>
    %6 = vector.broadcast %5 : vector<1x128xf32> to vector<8x128xf32>
    %7 = arith.addf %4, %6 : vector<8x128xf32>
    %8 = math.tanh %7 : vector<8x128xf32>
    %c0_5 = arith.constant 0 : index
    %c0_6 = arith.constant 0 : index
    %9 = vector.load %arg4[%c0_5, %c0_6] : memref<128x8xf32, #tpu.memory_space<vmem>>, vector<128x8xf32>
    %10 = arith.truncf %9 : vector<128x8xf32> to vector<128x8xbf16>
    %11 = arith.truncf %8 : vector<8x128xf32> to vector<8x128xbf16>
    %cst_7 = arith.constant dense<0.000000e+00> : vector<8x8xf32>
    %12 = tpu.matmul %11, %10, %cst_7 {dimension_numbers = #tpu.dot_dimension_numbers<[1], [0], [0], [1], [0, 0, 1, 1], [], []>} : vector<8x128xbf16>, vector<128x8xbf16>, vector<8x8xf32> -> vector<8x8xf32>
    %c0_8 = arith.constant 0 : index
    %c0_9 = arith.constant 0 : index
    %13 = vector.load %arg5[%c0_8, %c0_9] : memref<1x8xf32, #tpu.memory_space<vmem>>, vector<1x8xf32>
    %14 = vector.broadcast %13 : vector<1x8xf32> to vector<8x8xf32>
    %15 = arith.addf %12, %14 : vector<8x8xf32>
    %16 = math.tanh %15 : vector<8x8xf32>
    %c0_10 = arith.constant 0 : index
    %c0_11 = arith.constant 0 : index
    %17 = vector.load %arg6[%c0_10, %c0_11] : memref<8x8xf32, #tpu.memory_space<vmem>>, vector<8x8xf32>
    tpu.vector_store %arg6[%c0_10, %c0_11], %16 {strides = array<i32>} : memref<8x8xf32, #tpu.memory_space<vmem>>, vector<8x8xf32>,
    return
  }
  func.func @transform_0(%arg0: i32) -> (i32, i32) {
    %c0_i32 = arith.constant 0 : i32
    %c0_i32_0 = arith.constant 0 : i32
    return %arg0, %c0_i32 : i32, i32
  }
  func.func @transform_1(%arg0: i32) -> (i32, i32) {
    %c0_i32 = arith.constant 0 : i32
    %c0_i32_0 = arith.constant 0 : i32
    %c0_i32_1 = arith.constant 0 : i32
    return %c0_i32, %c0_i32_0 : i32, i32
  }
  func.func @transform_2(%arg0: i32) -> (i32, i32) {
    %c0_i32 = arith.constant 0 : i32
    %c0_i32_0 = arith.constant 0 : i32
    %c0_i32_1 = arith.constant 0 : i32
    return %c0_i32, %c0_i32_0 : i32, i32
  }
  func.func @transform_3(%arg0: i32) -> (i32, i32) {
    %c0_i32 = arith.constant 0 : i32
    %c0_i32_0 = arith.constant 0 : i32
    %c0_i32_1 = arith.constant 0 : i32
    return %c0_i32, %c0_i32_0 : i32, i32
  }
  func.func @transform_4(%arg0: i32) -> (i32, i32) {
    %c0_i32 = arith.constant 0 : i32
    %c0_i32_0 = arith.constant 0 : i32
    %c0_i32_1 = arith.constant 0 : i32
    return %c0_i32, %c0_i32_0 : i32, i32
  }
  func.func @transform_5(%arg0: i32) -> (i32, i32) {
    %c0_i32 = arith.constant 0 : i32
    %c0_i32_0 = arith.constant 0 : i32
    return %arg0, %c0_i32 : i32, i32
  }
}

</mosaic_0001>

<llo_original>
// kernel: mean_module_forward.1
$region0: #{mean_module_forward.1}
  #allocation0 [shape = 'u32[]', space=smem, size = 0x4, offset = 0x4, fixed_abs, tag = 'smem constant byte address 0x4 - core index']
  #allocation1 [shape = 'u32[144,128]{1,0:T(1,128)}', space=vmem, size = 0x12000, scoped, tag = 'internal scratch']
  %s0 = inlined_call_operand.vmem [shape: f32[8,32], index: 0, kind: input, shape index: {}]
  %s1 = inlined_call_operand.vmem [shape: f32[32,128], index: 1, kind: input, shape index: {}]
  %s2 = inlined_call_operand.vmem [shape: f32[1,128], index: 2, kind: input, shape index: {}]
  %s3 = inlined_call_operand.vmem [shape: f32[128,8], index: 3, kind: input, shape index: {}]
  %s4 = inlined_call_operand.vmem [shape: f32[1,8], index: 4, kind: input, shape index: {}]
  %s5 = inlined_call_operand.hbm [shape: f32[8,8], index: 5, kind: output, shape index: {}]
  %s6 = sld [smem:[#allocation0]]
  $region30: #{mean_module_forward.1} parent=0
    _
  %s8 = ssub.s32 1, %s6
  %s9 = scalar_select 0, %s8, %s6
  $region1: #{mean_module_forward.1} parent=0
    #allocation2 [shape = 'u8[4096]{0}', space=vmem, size = 0x1000, scoped, tag = 'output window, operand 0, single buffered']
    #allocation3 [shape = 's32[1]{0}', space=sflag, size = 0x4, scoped, tag = 'scoped memory for mean_module_forward.1']
    %10 = vsyncpa [#allocation3], 0
    // Predicated region
    $region2: #{mean_module_forward.1} parent=1 // pred_check
      _
    $region3: #{mean_module_forward.1} parent=1 // pred_check_branch
      %12 = sbr.rel (0) target = $region5
    $region4: #{mean_module_forward.1} parent=1 // pred_region
      _
    $region5: #{mean_module_forward.1} parent=1 // pred_fallthru
      _
    // Predicated region
    $region6: #{mean_module_forward.1} parent=1 // pred_check
      _
    $region7: #{mean_module_forward.1} parent=1 // pred_check_branch
      %14 = sbr.rel (0) target = $region9
    $region8: #{mean_module_forward.1} parent=1 // pred_region
      _
    $region9: #{mean_module_forward.1} parent=1 // pred_fallthru
      _
    // Predicated region
    $region10: #{mean_module_forward.1} parent=1 // pred_check
      _
    $region11: #{mean_module_forward.1} parent=1 // pred_check_branch
      %16 = sbr.rel (0) target = $region13
    $region12: #{mean_module_forward.1} parent=1 // pred_region
      _
    $region13: #{mean_module_forward.1} parent=1 // pred_fallthru
      _
    // Predicated region
    $region14: #{mean_module_forward.1} parent=1 // pred_check
      _
    $region15: #{mean_module_forward.1} parent=1 // pred_check_branch
      %18 = sbr.rel (0) target = $region17
    $region16: #{mean_module_forward.1} parent=1 // pred_region
      _
    $region17: #{mean_module_forward.1} parent=1 // pred_fallthru
      _
    // Predicated region
    $region18: #{mean_module_forward.1} parent=1 // pred_check
      _
    $region19: #{mean_module_forward.1} parent=1 // pred_check_branch
      %20 = sbr.rel (0) target = $region21
    $region20: #{mean_module_forward.1} parent=1 // pred_region
      _
    $region21: #{mean_module_forward.1} parent=1 // pred_fallthru
      _
    %v22 = vld [vmem:[%s0] sm:$0xff]
    %v23 = vpack.c.bf16 %v22, %v22
    %v24 = vld [vmem:[%s1] sm:$0xff]
    %v25 = vld [vmem:[%s1 + $0x8] sm:$0xff]
    %v26 = vld [vmem:[%s1 + $0x10] sm:$0xff]
    %v27 = vld [vmem:[%s1 + $0x18] sm:$0xff]
    %v28 = vpack.c.bf16 %v25, %v24
    %v29 = vpack.c.bf16 %v27, %v26
    %v30 = vld [vmem:[%s2] sm:$0x1]
    %v32 = vlaneseq
    %v33 = vshrl.u32 %v32, 7
    %v34 = vsub.s32 0, %v33
    %v35 = vrot.slane %v30, %v34
    %vm37 = vcmask 261120
    %v39 = vsel %vm37, %v23, 0
    %41 = vmatprep.subr.bf16.mxu0 0
    %42 = vmatpush1.bf16.msra.mxu0 %v28
    %43 = vmatprep.subr.bf16.mxu0 0
    %44 = vmatpush1.bf16.msra.mxu0 %v29
    %45 = vmatprep.subr.bf16.mxu0 0
    %46 = vmatpush1.bf16.msra.mxu0 0
    %47 = vmatprep.subr.bf16.mxu0 0
    %48 = vmatpush1.bf16.msra.mxu0 0
    %49 = vmatprep.subr.bf16.mxu0 0
    %50 = vmatpush1.bf16.msra.mxu0 0
    %51 = vmatprep.subr.bf16.mxu0 0
    %52 = vmatpush1.bf16.msra.mxu0 0
    %53 = vmatprep.subr.bf16.mxu0 0
    %54 = vmatpush1.bf16.msra.mxu0 0
    %55 = vmatprep.subr.bf16.mxu0 0
    %56 = vmatpush1.bf16.msra.mxu0 0
    %57 = vmatprep.subr.bf16.mxu0 0
    %58 = vmatpush1.bf16.msra.mxu0 0
    %59 = vmatprep.subr.bf16.mxu0 0
    %60 = vmatpush1.bf16.msra.mxu0 0
    %61 = vmatprep.subr.bf16.mxu0 0
    %62 = vmatpush1.bf16.msra.mxu0 0
    %63 = vmatprep.subr.bf16.mxu0 0
    %64 = vmatpush1.bf16.msra.mxu0 0
    %65 = vmatprep.subr.bf16.mxu0 0
    %66 = vmatpush1.bf16.msra.mxu0 0
    %67 = vmatprep.subr.bf16.mxu0 0
    %68 = vmatpush1.bf16.msra.mxu0 0
    %69 = vmatprep.subr.bf16.mxu0 0
    %70 = vmatpush1.bf16.msra.mxu0 0
    %71 = vmatprep.subr.bf16.mxu0 0
    %72 = vmatpush1.bf16.msra.mxu0 0
    %73 = vmatprep.mubr.bf16.mxu0 0
    %74 = vmatmul.mubr.bf16.gmra.mrb[0].mxu0 %v39
    %v75 = vpop.f32.mrb[0].mxu0
    %v76 = vadd.f32 %v35, %v75
    %v77 = vpop.f32.mrb[0].mxu0
    %v78 = vpop.f32.mrb[0].mxu0
    %v79 = vpop.f32.mrb[0].mxu0
    %80 = vdwg.mxu0
    %v81 = vtanh.pop %v76
    %v82 = vld [vmem:[%s3] sm:$0xff]
    %v83 = vld [vmem:[%s3 + $0x8] sm:$0xff]
    %v84 = vld [vmem:[%s3 + $0x10] sm:$0xff]
    %v85 = vld [vmem:[%s3 + $0x18] sm:$0xff]
    %v86 = vld [vmem:[%s3 + $0x20] sm:$0xff]
    %v87 = vld [vmem:[%s3 + $0x28] sm:$0xff]
    %v88 = vld [vmem:[%s3 + $0x30] sm:$0xff]
    %v89 = vld [vmem:[%s3 + $0x38] sm:$0xff]
    %v90 = vld [vmem:[%s3 + $0x40] sm:$0xff]
    %v91 = vld [vmem:[%s3 + $0x48] sm:$0xff]
    %v92 = vld [vmem:[%s3 + $0x50] sm:$0xff]
    %v93 = vld [vmem:[%s3 + $0x58] sm:$0xff]
    %v94 = vld [vmem:[%s3 + $0x60] sm:$0xff]
    %v95 = vld [vmem:[%s3 + $0x68] sm:$0xff]
    %v96 = vld [vmem:[%s3 + $0x70] sm:$0xff]
    %v97 = vld [vmem:[%s3 + $0x78] sm:$0xff]
    %v98 = vpack.c.bf16 %v83, %v82
    %v99 = vpack.c.bf16 %v85, %v84
    %v100 = vpack.c.bf16 %v87, %v86
    %v101 = vpack.c.bf16 %v89, %v88
    %v102 = vpack.c.bf16 %v91, %v90
    %v103 = vpack.c.bf16 %v93, %v92
    %v104 = vpack.c.bf16 %v95, %v94
    %v105 = vpack.c.bf16 %v97, %v96
    %v106 = vpack.c.bf16 %v81, %v81
    %v107 = vld [vmem:[%s4] sm:$0x1]
    %v109 = vlaneseq
    %v110 = vshrl.u32 %v109, 7
    %v111 = vsub.s32 0, %v110
    %v112 = vrot.slane %v107, %v111
    %114 = vmatprep.subr.bf16.mxu0 0
    %115 = vmatpush1.bf16.msra.mxu0 %v98
    %116 = vmatprep.subr.bf16.mxu0 0
    %117 = vmatpush1.bf16.msra.mxu0 %v99
    %118 = vmatprep.subr.bf16.mxu0 0
    %119 = vmatpush1.bf16.msra.mxu0 %v100
    %120 = vmatprep.subr.bf16.mxu0 0
    %121 = vmatpush1.bf16.msra.mxu0 %v101
    %122 = vmatprep.subr.bf16.mxu0 0
    %123 = vmatpush1.bf16.msra.mxu0 %v102
    %124 = vmatprep.subr.bf16.mxu0 0
    %125 = vmatpush1.bf16.msra.mxu0 %v103
    %126 = vmatprep.subr.bf16.mxu0 0
    %127 = vmatpush1.bf16.msra.mxu0 %v104
    %128 = vmatprep.subr.bf16.mxu0 0
    %129 = vmatpush1.bf16.msra.mxu0 %v105
    %130 = vmatprep.subr.bf16.mxu0 0
    %131 = vmatpush1.bf16.msra.mxu0 0
    %132 = vmatprep.subr.bf16.mxu0 0
    %133 = vmatpush1.bf16.msra.mxu0 0
    %134 = vmatprep.subr.bf16.mxu0 0
    %135 = vmatpush1.bf16.msra.mxu0 0
    %136 = vmatprep.subr.bf16.mxu0 0
    %137 = vmatpush1.bf16.msra.mxu0 0
    %138 = vmatprep.subr.bf16.mxu0 0
    %139 = vmatpush1.bf16.msra.mxu0 0
    %140 = vmatprep.subr.bf16.mxu0 0
    %141 = vmatpush1.bf16.msra.mxu0 0
    %142 = vmatprep.subr.bf16.mxu0 0
    %143 = vmatpush1.bf16.msra.mxu0 0
    %144 = vmatprep.subr.bf16.mxu0 0
    %145 = vmatpush1.bf16.msra.mxu0 0
    %146 = vmatprep.mubr.bf16.mxu0 0
    %147 = vmatmul.mubr.bf16.gmra.mrb[0].mxu0 %v106
    %v148 = vpop.f32.mrb[0].mxu0
    %v149 = vadd.f32 %v112, %v148
    %v150 = vpop.f32.mrb[0].mxu0
    %v151 = vpop.f32.mrb[0].mxu0
    %v152 = vpop.f32.mrb[0].mxu0
    %153 = vdwg.mxu0
    %v154 = vtanh.pop %v149
    %vm155 = vcmask 64512
    %156 = vst.msk [vmem:[#allocation2] sm:$0xff] %vm155, %v154
    // Predicated region
    $region22: #{mean_module_forward.1} parent=1 // pred_check
      _
    $region23: #{mean_module_forward.1} parent=1 // pred_check_branch
      %158 = sbr.rel (0) target = $region25
    $region24: #{mean_module_forward.1} parent=1 // pred_region
      %s160 = ssub.s32 128, 128
      %161 = vsyncadd [#allocation3], %s160
      %s163 = sshll.u32 [#allocation2], 4
      %s164 = int_to_ptr.vmem [resolvable:$true] %s163
      %166 = dma.vmem_to_hbm [thread:$0]  %s164, 128, %s5, [#allocation3]
    $region25: #{mean_module_forward.1} parent=1 // pred_fallthru
      _
    // Predicated region
    $region26: #{mean_module_forward.1} parent=1 // pred_check
      _
    $region27: #{mean_module_forward.1} parent=1 // pred_check_branch
      %168 = sbr.rel (0) target = $region29
    $region28: #{mean_module_forward.1} parent=1 // pred_region
      %169 = dma.done [#allocation3], 128
    $region29: #{mean_module_forward.1} parent=1 // pred_fallthru
      _
    %170 = vsyncpa [#allocation3], 1

</llo_original>
